<compile_context>
chip_gen: v6e
topology: v6e:2x2x1
jax: 0.10.0
libtpu: 0.0.40
codegen_flags: <defaults>
</compile_context>

<pallas_src>
import jax
import jax.numpy as jnp
from jax.experimental import pallas as pl
from jax.experimental.pallas import tpu as pltpu

IN_FEATURES = 28 * 28   # 784
K_PAD = 896             # 7 * 128, lane-aligned contraction dim
HIDDEN = 256
OUT_FEATURES = 10
OUT_PAD = 128           # lane-dense output width


def mlp_kernel(x_ref, w1_ref, b1_ref, w2_ref, b2_ref, o_ref):
    # fc1: (TILE_B, 896)bf16 @ (896, 256)bf16 -> f32 accumulate on the MXU
    h = jnp.dot(x_ref[...], w1_ref[...], preferred_element_type=jnp.float32)
    # bias + ReLU in f32 on the VPU
    h = jnp.maximum(h + b1_ref[...], 0.0)
    # Dropout(p=0.2): identity at inference (module.eval() semantics).
    # TODO(synk): training-mode dropout would use pltpu.prng_seed + pltpu.prng_random_bits.
    # fc2: (TILE_B, 256)bf16 @ (256, 128)bf16 -> f32, lane-dense 128-wide store
    o = jnp.dot(h.astype(w2_ref.dtype), w2_ref[...],
                preferred_element_type=jnp.float32) + b2_ref[...]
    o_ref[...] = o.astype(o_ref.dtype)


def mlp_forward(x_nchw, w1, b1, w2, b2, *, tile_b=256):
    """x_nchw: (B, 1, 28, 28) float32. w1:(784,256) b1:(256,)|(1,256) w2:(256,10) b2:(10,)|(1,10).
    Returns logits (B, 10) float32."""
    B = x_nchw.shape[0]
    x = x_nchw.reshape(B, IN_FEATURES).astype(jnp.float32)  # nn.Flatten()

    # --- wrapper-side padding / dtype prep (all zero padding, exact) ---
    tile_b = min(tile_b, max(8, ((B + 7) // 8) * 8))
    tile_b = ((tile_b + 7) // 8) * 8
    b_pad = ((B + tile_b - 1) // tile_b) * tile_b

    x_p = jnp.zeros((b_pad, K_PAD), jnp.bfloat16)
    x_p = x_p.at[:B, :IN_FEATURES].set(x.astype(jnp.bfloat16))

    w1_p = jnp.zeros((K_PAD, HIDDEN), jnp.bfloat16)
    w1_p = w1_p.at[:IN_FEATURES, :].set(w1.astype(jnp.bfloat16))
    b1_p = b1.reshape(1, HIDDEN).astype(jnp.float32)

    w2_p = jnp.zeros((HIDDEN, OUT_PAD), jnp.bfloat16)
    w2_p = w2_p.at[:, :OUT_FEATURES].set(w2.astype(jnp.bfloat16))
    b2_p = jnp.zeros((1, OUT_PAD), jnp.float32)
    b2_p = b2_p.at[:, :OUT_FEATURES].set(b2.reshape(1, OUT_FEATURES).astype(jnp.float32))

    grid = (b_pad // tile_b,)
    out = pl.pallas_call(
        mlp_kernel,
        out_shape=jax.ShapeDtypeStruct((b_pad, OUT_PAD), jnp.float32),
        grid=grid,
        in_specs=[
            pl.BlockSpec((tile_b, K_PAD), lambda i: (i, 0)),   # x: streamed per batch tile
            pl.BlockSpec((K_PAD, HIDDEN), lambda i: (0, 0)),   # w1: resident in VMEM
            pl.BlockSpec((1, HIDDEN), lambda i: (0, 0)),       # b1: resident
            pl.BlockSpec((HIDDEN, OUT_PAD), lambda i: (0, 0)), # w2: resident
            pl.BlockSpec((1, OUT_PAD), lambda i: (0, 0)),      # b2: resident
        ],
        out_specs=pl.BlockSpec((tile_b, OUT_PAD), lambda i: (i, 0)),
        compiler_params=pltpu.CompilerParams(
            dimension_semantics=("parallel",)),
    )(x_p, w1_p, b1_p, w2_p, b2_p)

    return out[:B, :OUT_FEATURES]


def init_params(key):
    """Deterministic init mimicking nn.Linear's U(-1/sqrt(fan_in), 1/sqrt(fan_in)).
    Weights stored as (in, out) so the kernel computes y = x @ W + b."""
    k1, k2, k3, k4 = jax.random.split(key, 4)
    bound1 = 1.0 / jnp.sqrt(IN_FEATURES)
    bound2 = 1.0 / jnp.sqrt(HIDDEN)
    w1 = jax.random.uniform(k1, (IN_FEATURES, HIDDEN), jnp.float32, -bound1, bound1)
    b1 = jax.random.uniform(k2, (1, HIDDEN), jnp.float32, -bound1, bound1)
    w2 = jax.random.uniform(k3, (HIDDEN, OUT_FEATURES), jnp.float32, -bound2, bound2)
    b2 = jax.random.uniform(k4, (1, OUT_FEATURES), jnp.float32, -bound2, bound2)
    return w1, b1, w2, b2


if __name__ == "__main__":
    key = jax.random.PRNGKey(0)
    kx, kp = jax.random.split(key)

    B = 16
    x = jax.random.normal(kx, (B, 1, 28, 28), jnp.float32)  # NCHW, like MNIST
    w1, b1, w2, b2 = init_params(kp)

    # tile_b=8 here so the 1-D batch grid has 2 steps and the pipelined path is exercised.
    out = mlp_forward(x, w1, b1, w2, b2, tile_b=8)
    out = jax.block_until_ready(out)
    assert out.shape == (B, OUT_FEATURES)

    # reference using the same bf16-rounded inputs the kernel sees (f32 accumulation)
    xf = x.reshape(B, IN_FEATURES)
    x_bf = xf.astype(jnp.bfloat16).astype(jnp.float32)
    w1_bf = w1.astype(jnp.bfloat16).astype(jnp.float32)
    w2_bf = w2.astype(jnp.bfloat16).astype(jnp.float32)
    h_ref = jnp.maximum(x_bf @ w1_bf + b1, 0.0)
    ref = h_ref.astype(jnp.bfloat16).astype(jnp.float32) @ w2_bf + b2
    assert jnp.allclose(out, ref, atol=2e-3, rtol=2e-3), \
        f"max abs err {jnp.max(jnp.abs(out - ref))}"

    print("KERNEL_OK")
</pallas_src>

<mosaic_0001>
module attributes {stable_mosaic.version = 11 : i64} {
  func.func @mlp_kernel(%arg0: i32, %arg1: memref<8x896xbf16, #tpu.memory_space<vmem>>, %arg2: memref<896x256xbf16, #tpu.memory_space<vmem>>, %arg3: memref<1x256xf32, #tpu.memory_space<vmem>>, %arg4: memref<256x128xbf16, #tpu.memory_space<vmem>>, %arg5: memref<1x128xf32, #tpu.memory_space<vmem>>, %arg6: memref<8x128xf32, #tpu.memory_space<vmem>>) attributes {dimension_semantics = [#tpu.dimension_semantics<parallel>], iteration_bounds = array<i64: 2>, scalar_prefetch = 0 : i64, scratch_operands = 0 : i64, tpu.core_type = #tpu.core_type<tc>, window_params = [{transform_indices = @transform_0, window_bounds = array<i64: 8, 896>}, {pipeline_mode = #tpu.pipeline_mode<synchronous>, transform_indices = @transform_1, window_bounds = array<i64: 896, 256>}, {pipeline_mode = #tpu.pipeline_mode<synchronous>, transform_indices = @transform_2, window_bounds = array<i64: 1, 256>}, {pipeline_mode = #tpu.pipeline_mode<synchronous>, transform_indices = @transform_3, window_bounds = array<i64: 256, 128>}, {pipeline_mode = #tpu.pipeline_mode<synchronous>, transform_indices = @transform_4, window_bounds = array<i64: 1, 128>}, {transform_indices = @transform_5, window_bounds = array<i64: 8, 128>}]} {
    %c0 = arith.constant 0 : index
    %c0_0 = arith.constant 0 : index
    %0 = vector.load %arg1[%c0, %c0_0] : memref<8x896xbf16, #tpu.memory_space<vmem>>, vector<8x896xbf16>
    %c0_1 = arith.constant 0 : index
    %c0_2 = arith.constant 0 : index
    %1 = vector.load %arg2[%c0_1, %c0_2] : memref<896x256xbf16, #tpu.memory_space<vmem>>, vector<896x256xbf16>
    %cst = arith.constant dense<0.000000e+00> : vector<8x256xf32>
    %2 = tpu.matmul %0, %1, %cst {dimension_numbers = #tpu.dot_dimension_numbers<[1], [0], [0], [1], [0, 0, 1, 1], [], []>} : vector<8x896xbf16>, vector<896x256xbf16>, vector<8x256xf32> -> vector<8x256xf32>
    %c0_3 = arith.constant 0 : index
    %c0_4 = arith.constant 0 : index
    %3 = vector.load %arg3[%c0_3, %c0_4] : memref<1x256xf32, #tpu.memory_space<vmem>>, vector<1x256xf32>
    %4 = vector.broadcast %3 : vector<1x256xf32> to vector<8x256xf32>
    %5 = arith.addf %2, %4 : vector<8x256xf32>
    %cst_5 = arith.constant 0.000000e+00 : f32
    %6 = vector.broadcast %cst_5 : f32 to vector<8x256xf32>
    %7 = arith.maximumf %5, %6 : vector<8x256xf32>
    %8 = arith.truncf %7 : vector<8x256xf32> to vector<8x256xbf16>
    %c0_6 = arith.constant 0 : index
    %c0_7 = arith.constant 0 : index
    %9 = vector.load %arg4[%c0_6, %c0_7] : memref<256x128xbf16, #tpu.memory_space<vmem>>, vector<256x128xbf16>
    %cst_8 = arith.constant dense<0.000000e+00> : vector<8x128xf32>
    %10 = tpu.matmul %8, %9, %cst_8 {dimension_numbers = #tpu.dot_dimension_numbers<[1], [0], [0], [1], [0, 0, 1, 1], [], []>} : vector<8x256xbf16>, vector<256x128xbf16>, vector<8x128xf32> -> vector<8x128xf32>
    %c0_9 = arith.constant 0 : index
    %c0_10 = arith.constant 0 : index
    %11 = vector.load %arg5[%c0_9, %c0_10] : memref<1x128xf32, #tpu.memory_space<vmem>>, vector<1x128xf32>
    %12 = vector.broadcast %11 : vector<1x128xf32> to vector<8x128xf32>
    %13 = arith.addf %10, %12 : vector<8x128xf32>
    %c0_11 = arith.constant 0 : index
    %c0_12 = arith.constant 0 : index
    %14 = vector.load %arg6[%c0_11, %c0_12] : memref<8x128xf32, #tpu.memory_space<vmem>>, vector<8x128xf32>
    tpu.vector_store %arg6[%c0_11, %c0_12], %13 {strides = array<i32>} : memref<8x128xf32, #tpu.memory_space<vmem>>, vector<8x128xf32>,
    return
  }
  func.func @transform_0(%arg0: i32) -> (i32, i32) {
    %c0_i32 = arith.constant 0 : i32
    %c0_i32_0 = arith.constant 0 : i32
    return %arg0, %c0_i32 : i32, i32
  }
  func.func @transform_1(%arg0: i32) -> (i32, i32) {
    %c0_i32 = arith.constant 0 : i32
    %c0_i32_0 = arith.constant 0 : i32
    %c0_i32_1 = arith.constant 0 : i32
    return %c0_i32, %c0_i32_0 : i32, i32
  }
  func.func @transform_2(%arg0: i32) -> (i32, i32) {
    %c0_i32 = arith.constant 0 : i32
    %c0_i32_0 = arith.constant 0 : i32
    %c0_i32_1 = arith.constant 0 : i32
    return %c0_i32, %c0_i32_0 : i32, i32
  }
  func.func @transform_3(%arg0: i32) -> (i32, i32) {
    %c0_i32 = arith.constant 0 : i32
    %c0_i32_0 = arith.constant 0 : i32
    %c0_i32_1 = arith.constant 0 : i32
    return %c0_i32, %c0_i32_0 : i32, i32
  }
  func.func @transform_4(%arg0: i32) -> (i32, i32) {
    %c0_i32 = arith.constant 0 : i32
    %c0_i32_0 = arith.constant 0 : i32
    %c0_i32_1 = arith.constant 0 : i32
    return %c0_i32, %c0_i32_0 : i32, i32
  }
  func.func @transform_5(%arg0: i32) -> (i32, i32) {
    %c0_i32 = arith.constant 0 : i32
    %c0_i32_0 = arith.constant 0 : i32
    return %arg0, %c0_i32 : i32, i32
  }
}

</mosaic_0001>

<llo_original>
// kernel: tpu_custom_call.1
$region0: #{tpu_custom_call.1}
  #allocation0 [shape = 'u32[]', space=smem, size = 0x4, offset = 0x4, fixed_abs, tag = 'smem constant byte address 0x4 - core index']
  #allocation1 [shape = 'u32[144,128]{1,0:T(1,128)}', space=vmem, size = 0x12000, scoped, tag = 'internal scratch']
  %s0 = inlined_call_operand.hbm [shape: bf16[16,896], index: 0, kind: input, shape index: {}]
  %s1 = inlined_call_operand.hbm [shape: bf16[896,256], index: 1, kind: input, shape index: {}]
  %s2 = inlined_call_operand.vmem [shape: f32[1,256], index: 2, kind: input, shape index: {}]
  %s3 = inlined_call_operand.hbm [shape: bf16[256,128], index: 3, kind: input, shape index: {}]
  %s4 = inlined_call_operand.vmem [shape: f32[1,128], index: 4, kind: input, shape index: {}]
  %s5 = inlined_call_operand.hbm [shape: f32[16,128], index: 5, kind: output, shape index: {}]
  %s6 = sld [smem:[#allocation0]]
  $region65: #{tpu_custom_call.1} parent=0
    _
  %s8 = ssub.s32 1, %s6
  %s9 = scalar_select 0, %s8, %s6
  $region1: #{tpu_custom_call.1} parent=0
    #allocation2 [shape = 'u8[28672]{0}', space=vmem, size = 0x7000, scoped, tag = 'input window, operand 0']
    #allocation3 [shape = 's32[2]{0}', space=sflag, size = 0x8, scoped, tag = 'scoped memory for tpu_custom_call.1']
    #allocation4 [shape = 's32[2]{0}', space=sflag, size = 0x8, scoped, tag = 'scoped memory for tpu_custom_call.1']
    #allocation5 [shape = 'u8[458752]{0}', space=vmem, size = 0x70000, scoped, tag = 'input window, operand 1, single buffered']
    #allocation6 [shape = 's32[1]{0}', space=sflag, size = 0x4, scoped, tag = 'scoped memory for tpu_custom_call.1']
    #allocation7 [shape = 'u8[65536]{0}', space=vmem, size = 0x10000, scoped, tag = 'input window, operand 3, single buffered']
    #allocation8 [shape = 'u8[8192]{0}', space=vmem, size = 0x2000, scoped, tag = 'output window, operand 0']
    %10 = vsyncpa [#allocation3], 0
    %s11 = scalar_lea.sflag [#allocation3], 1
    %12 = vsyncpa %s11, 0
    %13 = vsyncpa [#allocation6], 0
    %14 = vsyncpa [#allocation4], 0
    %s15 = scalar_lea.sflag [#allocation4], 1
    %16 = vsyncpa %s15, 0
    loop: start=0, step=1, limit=4
    $region2: #{tpu_custom_call.1} parent=1 // loop_pre_header
      _
    $region3: #{tpu_custom_call.1} parent=1 // loop_header
      %s18 = sphi 0, %s22
      %p19 = scmp.ge.s32.totalorder %s18, 4
      %s28 = sphi 0, %s30
      %s31 = sphi 0, %s28
      %s32 = sphi 0, %s31
      %s48 = sphi 0, %s32
      %s52 = sphi 0, %s52
      %s54 = sphi 0, %s52
      %s55 = sphi 0, %s54
      %s69 = sphi 0, %s55
      %s73 = sphi 0, %s73
      %s75 = sphi 0, %s73
      %s76 = sphi 0, %s75
      %s90 = sphi 0, %s76
      %s94 = sphi 0, %s94
      %s96 = sphi 0, %s94
      %s97 = sphi 0, %s96
      %s111 = sphi 0, %s97
      %s115 = sphi 0, %s115
      %s117 = sphi 0, %s115
      %s118 = sphi 0, %s117
      %s132 = sphi 0, %s118
      %s138 = sphi 0, %s140
      %s141 = sphi 0, %s138
      %s142 = sphi 0, %s141
      %s158 = sphi 0, %s142
    $region4: #{tpu_custom_call.1} parent=1 // loop_header_branch
      %21 = sbr.rel (%p19) target = $region8
    $region5: #{tpu_custom_call.1} parent=1 // loop_body
      %s23 = ssub.s32 %s18, 1
      %s24 = ssub.s32 %s18, 2
      %s25 = sadd.s32 %s18, 1
      %s26 = ssub.s32 %s18, %s25
      %p27 = scmp.eq.s32.totalorder %s26, 0
      %s29 = sadd.s32 %s28, 1
      %s30 = scalar_select %p27, %s28, %s29
      %p33 = pneg %p27
      %p34 = scmp.eq.s32.totalorder %s18, 1
      %p35 = por %p33, %p34
      %p36 = scmp.ne.s32.totalorder %s28, %s31
      %p37 = scmp.eq.s32.totalorder %s18, 0
      %p38 = por %p36, %p37
      %p39 = scmp.ne.s32.totalorder %s28, %s31
      %p40 = scmp.eq.s32.totalorder %s23, 1
      %p41 = por %p39, %p40
      %p42 = scmp.ne.s32.totalorder %s31, %s32
      %p43 = scmp.eq.s32.totalorder %s23, 0
      %p44 = por %p42, %p43
      %p45 = scmp.ne.s32.totalorder %s31, %s32
      %p46 = scmp.eq.s32.totalorder %s24, 1
      %p47 = por %p45, %p46
      %p49 = scmp.ne.s32.totalorder %s32, %s48
      %p50 = scmp.eq.s32.totalorder %s24, 0
      %p51 = por %p49, %p50
      %s53 = sadd.s32 %s52, 1
      %p56 = scmp.eq.s32.totalorder %s18, 1
      %p57 = scmp.ne.s32.totalorder %s52, %s54
      %p58 = scmp.eq.s32.totalorder %s18, 0
      %p59 = por %p57, %p58
      %p60 = scmp.ne.s32.totalorder %s52, %s54
      %p61 = scmp.eq.s32.totalorder %s23, 1
      %p62 = por %p60, %p61
      %p63 = scmp.ne.s32.totalorder %s54, %s55
      %p64 = scmp.eq.s32.totalorder %s23, 0
      %p65 = por %p63, %p64
      %p66 = scmp.ne.s32.totalorder %s54, %s55
      %p67 = scmp.eq.s32.totalorder %s24, 1
      %p68 = por %p66, %p67
      %p70 = scmp.ne.s32.totalorder %s55, %s69
      %p71 = scmp.eq.s32.totalorder %s24, 0
      %p72 = por %p70, %p71
      %s74 = sadd.s32 %s73, 1
      %p77 = scmp.eq.s32.totalorder %s18, 1
      %p78 = scmp.ne.s32.totalorder %s73, %s75
      %p79 = scmp.eq.s32.totalorder %s18, 0
      %p80 = por %p78, %p79
      %p81 = scmp.ne.s32.totalorder %s73, %s75
      %p82 = scmp.eq.s32.totalorder %s23, 1
      %p83 = por %p81, %p82
      %p84 = scmp.ne.s32.totalorder %s75, %s76
      %p85 = scmp.eq.s32.totalorder %s23, 0
      %p86 = por %p84, %p85
      %p87 = scmp.ne.s32.totalorder %s75, %s76
      %p88 = scmp.eq.s32.totalorder %s24, 1
      %p89 = por %p87, %p88
      %p91 = scmp.ne.s32.totalorder %s76, %s90
      %p92 = scmp.eq.s32.totalorder %s24, 0
      %p93 = por %p91, %p92
      %s95 = sadd.s32 %s94, 1
      %p98 = scmp.eq.s32.totalorder %s18, 1
      %p99 = scmp.ne.s32.totalorder %s94, %s96
      %p100 = scmp.eq.s32.totalorder %s18, 0
      %p101 = por %p99, %p100
      %p102 = scmp.ne.s32.totalorder %s94, %s96
      %p103 = scmp.eq.s32.totalorder %s23, 1
      %p104 = por %p102, %p103
      %p105 = scmp.ne.s32.totalorder %s96, %s97
      %p106 = scmp.eq.s32.totalorder %s23, 0
      %p107 = por %p105, %p106
      %p108 = scmp.ne.s32.totalorder %s96, %s97
      %p109 = scmp.eq.s32.totalorder %s24, 1
      %p110 = por %p108, %p109
      %p112 = scmp.ne.s32.totalorder %s97, %s111
      %p113 = scmp.eq.s32.totalorder %s24, 0
      %p114 = por %p112, %p113
      %s116 = sadd.s32 %s115, 1
      %p119 = scmp.eq.s32.totalorder %s18, 1
      %p120 = scmp.ne.s32.totalorder %s115, %s117
      %p121 = scmp.eq.s32.totalorder %s18, 0
      %p122 = por %p120, %p121
      %p123 = scmp.ne.s32.totalorder %s115, %s117
      %p124 = scmp.eq.s32.totalorder %s23, 1
      %p125 = por %p123, %p124
      %p126 = scmp.ne.s32.totalorder %s117, %s118
      %p127 = scmp.eq.s32.totalorder %s23, 0
      %p128 = por %p126, %p127
      %p129 = scmp.ne.s32.totalorder %s117, %s118
      %p130 = scmp.eq.s32.totalorder %s24, 1
      %p131 = por %p129, %p130
      %p133 = scmp.ne.s32.totalorder %s118, %s132
      %p134 = scmp.eq.s32.totalorder %s24, 0
      %p135 = por %p133, %p134
      %s136 = ssub.s32 %s18, %s25
      %p137 = scmp.eq.s32.totalorder %s136, 0
      %s139 = sadd.s32 %s138, 1
      %s140 = scalar_select %p137, %s138, %s139
      %p143 = pneg %p137
      %p144 = scmp.eq.s32.totalorder %s18, 1
      %p145 = por %p143, %p144
      %p146 = scmp.ne.s32.totalorder %s138, %s141
      %p147 = scmp.eq.s32.totalorder %s18, 0
      %p148 = por %p146, %p147
      %p149 = scmp.ne.s32.totalorder %s138, %s141
      %p150 = scmp.eq.s32.totalorder %s23, 1
      %p151 = por %p149, %p150
      %p152 = scmp.ne.s32.totalorder %s141, %s142
      %p153 = scmp.eq.s32.totalorder %s23, 0
      %p154 = por %p152, %p153
      %p155 = scmp.ne.s32.totalorder %s141, %s142
      %p156 = scmp.eq.s32.totalorder %s24, 1
      %p157 = por %p155, %p156
      %p159 = scmp.ne.s32.totalorder %s142, %s158
      %p160 = scmp.eq.s32.totalorder %s24, 0
      %p161 = por %p159, %p160
      %p162 = scmp.le.s32.totalorder 1, %s18
      %p163 = scmp.lt.s32.totalorder %s18, 3
      %p164 = pnand %p162, %p163
      %p165 = pneg %p164
      // Predicated region
      $region9: #{tpu_custom_call.1} parent=5 // pred_check
        _
      $region10: #{tpu_custom_call.1} parent=5 // pred_check_branch
        %167 = sbr.rel (%p164) target = $region12
      $region11: #{tpu_custom_call.1} parent=5 // pred_region
        %s168 = ssub.s32 %s18, 1
        // Predicated region
        $region13: #{tpu_custom_call.1} parent=11 // pred_check
          %p169 = pneg %p65
        $region14: #{tpu_custom_call.1} parent=11 // pred_check_branch
          %171 = sbr.rel (%p169) target = $region16
        $region15: #{tpu_custom_call.1} parent=11 // pred_region
          %s173 = ssub.s32 14336, 14336
          %174 = vsyncadd [#allocation6], %s173
          %s175 = sshll.u32 [#allocation5], 4
          %s176 = int_to_ptr.vmem [resolvable:$true] %s175
          %181 = dma.hbm_to_vmem [thread:$0]  %s1, 14336, %s176, [#allocation6], 128, 128, 8
        $region16: #{tpu_custom_call.1} parent=11 // pred_fallthru
          _
        // Predicated region
        $region17: #{tpu_custom_call.1} parent=11 // pred_check
          %p182 = pneg %p86
        $region18: #{tpu_custom_call.1} parent=11 // pred_check_branch
          %184 = sbr.rel (%p182) target = $region20
        $region19: #{tpu_custom_call.1} parent=11 // pred_region
          _
        $region20: #{tpu_custom_call.1} parent=11 // pred_fallthru
          _
        // Predicated region
        $region21: #{tpu_custom_call.1} parent=11 // pred_check
          %p185 = pneg %p107
        $region22: #{tpu_custom_call.1} parent=11 // pred_check_branch
          %187 = sbr.rel (%p185) target = $region24
        $region23: #{tpu_custom_call.1} parent=11 // pred_region
          %s189 = ssub.s32 2048, 2048
          %190 = vsyncadd [#allocation6], %s189
          %s191 = sshll.u32 [#allocation7], 4
          %s192 = int_to_ptr.vmem [resolvable:$true] %s191
          %197 = dma.hbm_to_vmem [thread:$0]  %s3, 2048, %s192, [#allocation6], 64, 64, 4
        $region24: #{tpu_custom_call.1} parent=11 // pred_fallthru
          _
        // Predicated region
        $region25: #{tpu_custom_call.1} parent=11 // pred_check
          %p198 = pneg %p128
        $region26: #{tpu_custom_call.1} parent=11 // pred_check_branch
          %200 = sbr.rel (%p198) target = $region28
        $region27: #{tpu_custom_call.1} parent=11 // pred_region
          _
        $region28: #{tpu_custom_call.1} parent=11 // pred_fallthru
          _
      $region12: #{tpu_custom_call.1} parent=5 // pred_fallthru
        _
      %p201 = scmp.lt.s32.totalorder %s18, 2
      // Predicated region
      $region29: #{tpu_custom_call.1} parent=5 // pred_check
        %p202 = pneg %p201
      $region30: #{tpu_custom_call.1} parent=5 // pred_check_branch
        %204 = sbr.rel (%p202) target = $region32
      $region31: #{tpu_custom_call.1} parent=5 // pred_region
        // Predicated region
        $region33: #{tpu_custom_call.1} parent=31 // pred_check
          %p205 = pneg %p38
        $region34: #{tpu_custom_call.1} parent=31 // pred_check_branch
          %207 = sbr.rel (%p205) target = $region36
        $region35: #{tpu_custom_call.1} parent=31 // pred_region
          %s208 = sand.u32 %s28, 1
          %s209 = scalar_lea.sflag [#allocation3], %s208
          %s210 = sand.u32 %s28, 1
          %s211 = smul.addr %s210, 28
          %s212 = scalar_lea.vmem [#allocation2], %s211
          %s214 = ssub.s32 448, 448
          %215 = vsyncadd %s209, %s214
          %s216 = smul.addr %s18, 7
          %s217 = smul.addr %s216, 64
          %s218 = scalar_lea.hbm %s0, %s217
          %s220 = sshll.u32 %s212, 4
          %s221 = int_to_ptr.vmem [resolvable:$true] %s220
          %223 = dma.hbm_to_vmem [thread:$0]  %s218, 448, %s221, %s209
        $region36: #{tpu_custom_call.1} parent=31 // pred_fallthru
          _
      $region32: #{tpu_custom_call.1} parent=5 // pred_fallthru
        _
      %p224 = scmp.le.s32.totalorder 1, %s18
      %p225 = scmp.lt.s32.totalorder %s18, 3
      %p226 = pnand %p224, %p225
      %p227 = pneg %p226
      // Predicated region
      $region37: #{tpu_custom_call.1} parent=5 // pred_check
        _
      $region38: #{tpu_custom_call.1} parent=5 // pred_check_branch
        %229 = sbr.rel (%p226) target = $region40
      $region39: #{tpu_custom_call.1} parent=5 // pred_region
        %s230 = ssub.s32 %s18, 1
        %s231 = sand.u32 %s31, 1
        %s232 = scalar_lea.sflag [#allocation3], %s231
        %s233 = sand.u32 %s31, 1
        %s234 = smul.addr %s233, 28
        %s235 = scalar_lea.vmem [#allocation2], %s234
        // Predicated region
        $region41: #{tpu_custom_call.1} parent=39 // pred_check
          %p236 = pneg %p44
        $region42: #{tpu_custom_call.1} parent=39 // pred_check_branch
          %238 = sbr.rel (%p236) target = $region44
        $region43: #{tpu_custom_call.1} parent=39 // pred_region
          %239 = dma.done %s232, 448
        $region44: #{tpu_custom_call.1} parent=39 // pred_fallthru
          _
        // Predicated region
        $region45: #{tpu_custom_call.1} parent=39 // pred_check
          %p240 = pneg %p65
        $region46: #{tpu_custom_call.1} parent=39 // pred_check_branch
          %242 = sbr.rel (%p240) target = $region48
        $region47: #{tpu_custom_call.1} parent=39 // pred_region
          %243 = dma.done [#allocation6], 14336
        $region48: #{tpu_custom_call.1} parent=39 // pred_fallthru
          _
        // Predicated region
        $region49: #{tpu_custom_call.1} parent=39 // pred_check
          %p244 = pneg %p107
        $region50: #{tpu_custom_call.1} parent=39 // pred_check_branch
          %246 = sbr.rel (%p244) target = $region52
        $region51: #{tpu_custom_call.1} parent=39 // pred_region
          %247 = dma.done [#allocation6], 2048
        $region52: #{tpu_custom_call.1} parent=39 // pred_fallthru
          _
        %s248 = sand.u32 %s31, 1
        %s249 = scalar_lea.sflag [#allocation3], %s248
        %s250 = sand.u32 %s31, 1
        %s251 = smul.addr %s250, 28
        %s252 = scalar_lea.vmem [#allocation2], %s251
        %p253 = pneg %p44
        %p254 = pneg %p41
        %p255 = pneg %p65
        %p256 = pneg %p62
        %p257 = pneg %p86
        %p258 = pneg %p83
        %p259 = pneg %p107
        %p260 = pneg %p104
        %p261 = pneg %p128
        %p262 = pneg %p125
        %p263 = pneg %p154
        %p264 = pneg %p151
        %s265 = sand.u32 %s141, 1
        %s266 = scalar_lea.sflag [#allocation4], %s265
        %s267 = sand.u32 %s141, 1
        %s268 = smul.addr %s267, 8
        %s269 = scalar_lea.vmem [#allocation8], %s268
        %v271 = vld [vmem:[%s235] sm:$0xff]
        %v272 = vld [vmem:[%s235 + $0x8] sm:$0xff]
        %v273 = vld [vmem:[%s235 + $0x10] sm:$0xff]
        %v274 = vld [vmem:[%s235 + $0x18] sm:$0xf]
        %v275 = vld [vmem:[#allocation5] sm:$0xff]
        %v276 = vld [vmem:[#allocation5 + $0x8] sm:$0xff]
        %v277 = vld [vmem:[#allocation5 + $0x10] sm:$0xff]
        %v278 = vld [vmem:[#allocation5 + $0x18] sm:$0xff]
        %v279 = vld [vmem:[#allocation5 + $0x20] sm:$0xff]
        %v280 = vld [vmem:[#allocation5 + $0x28] sm:$0xff]
        %v281 = vld [vmem:[#allocation5 + $0x30] sm:$0xff]
        %v282 = vld [vmem:[#allocation5 + $0x38] sm:$0xff]
        %v283 = vld [vmem:[#allocation5 + $0x40] sm:$0xff]
        %v284 = vld [vmem:[#allocation5 + $0x48] sm:$0xff]
        %v285 = vld [vmem:[#allocation5 + $0x50] sm:$0xff]
        %v286 = vld [vmem:[#allocation5 + $0x58] sm:$0xff]
        %v287 = vld [vmem:[#allocation5 + $0x60] sm:$0xff]
        %v288 = vld [vmem:[#allocation5 + $0x68] sm:$0xff]
        %v289 = vld [vmem:[#allocation5 + $0x70] sm:$0xff]
        %v290 = vld [vmem:[#allocation5 + $0x78] sm:$0xff]
        %v291 = vld [vmem:[#allocation5 + $0x80] sm:$0xff]
        %v292 = vld [vmem:[#allocation5 + $0x88] sm:$0xff]
        %v293 = vld [vmem:[#allocation5 + $0x90] sm:$0xff]
        %v294 = vld [vmem:[#allocation5 + $0x98] sm:$0xff]
        %v295 = vld [vmem:[#allocation5 + $0xa0] sm:$0xff]
        %v296 = vld [vmem:[#allocation5 + $0xa8] sm:$0xff]
        %v297 = vld [vmem:[#allocation5 + $0xb0] sm:$0xff]
        %v298 = vld [vmem:[#allocation5 + $0xb8] sm:$0xff]
        %v299 = vld [vmem:[#allocation5 + $0xc0] sm:$0xff]
        %v300 = vld [vmem:[#allocation5 + $0xc8] sm:$0xff]
        %v301 = vld [vmem:[#allocation5 + $0xd0] sm:$0xff]
        %v302 = vld [vmem:[#allocation5 + $0xd8] sm:$0xff]
        %v303 = vld [vmem:[#allocation5 + $0xe0] sm:$0xff]
        %v304 = vld [vmem:[#allocation5 + $0xe8] sm:$0xff]
        %v305 = vld [vmem:[#allocation5 + $0xf0] sm:$0xff]
        %v306 = vld [vmem:[#allocation5 + $0xf8] sm:$0xff]
        %v307 = vld [vmem:[#allocation5 + $0x100] sm:$0xff]
        %v308 = vld [vmem:[#allocation5 + $0x108] sm:$0xff]
        %v309 = vld [vmem:[#allocation5 + $0x110] sm:$0xff]
        %v310 = vld [vmem:[#allocation5 + $0x118] sm:$0xff]
        %v311 = vld [vmem:[#allocation5 + $0x120] sm:$0xff]
        %v312 = vld [vmem:[#allocation5 + $0x128] sm:$0xff]
        %v313 = vld [vmem:[#allocation5 + $0x130] sm:$0xff]
        %v314 = vld [vmem:[#allocation5 + $0x138] sm:$0xff]
        %v315 = vld [vmem:[#allocation5 + $0x140] sm:$0xff]
        %v316 = vld [vmem:[#allocation5 + $0x148] sm:$0xff]
        %v317 = vld [vmem:[#allocation5 + $0x150] sm:$0xff]
        %v318 = vld [vmem:[#allocation5 + $0x158] sm:$0xff]
        %v319 = vld [vmem:[#allocation5 + $0x160] sm:$0xff]
        %v320 = vld [vmem:[#allocation5 + $0x168] sm:$0xff]
        %v321 = vld [vmem:[#allocation5 + $0x170] sm:$0xff]
        %v322 = vld [vmem:[#allocation5 + $0x178] sm:$0xff]
        %v323 = vld [vmem:[#allocation5 + $0x180] sm:$0xff]
        %v324 = vld [vmem:[#allocation5 + $0x188] sm:$0xff]
        %v325 = vld [vmem:[#allocation5 + $0x190] sm:$0xff]
        %v326 = vld [vmem:[#allocation5 + $0x198] sm:$0xff]
        %v327 = vld [vmem:[#allocation5 + $0x1a0] sm:$0xff]
        %v328 = vld [vmem:[#allocation5 + $0x1a8] sm:$0xff]
        %v329 = vld [vmem:[#allocation5 + $0x1b0] sm:$0xff]
        %v330 = vld [vmem:[#allocation5 + $0x1b8] sm:$0xff]
        %v331 = vld [vmem:[#allocation5 + $0x1c0] sm:$0xff]
        %v332 = vld [vmem:[#allocation5 + $0x1c8] sm:$0xff]
        %v333 = vld [vmem:[#allocation5 + $0x1d0] sm:$0xff]
        %v334 = vld [vmem:[#allocation5 + $0x1d8] sm:$0xff]
        %v335 = vld [vmem:[#allocation5 + $0x1e0] sm:$0xff]
        %v336 = vld [vmem:[#allocation5 + $0x1e8] sm:$0xff]
        %v337 = vld [vmem:[#allocation5 + $0x1f0] sm:$0xff]
        %v338 = vld [vmem:[#allocation5 + $0x1f8] sm:$0xff]
        %v339 = vld [vmem:[#allocation5 + $0x200] sm:$0xff]
        %v340 = vld [vmem:[#allocation5 + $0x208] sm:$0xff]
        %v341 = vld [vmem:[#allocation5 + $0x210] sm:$0xff]
        %v342 = vld [vmem:[#allocation5 + $0x218] sm:$0xff]
        %v343 = vld [vmem:[#allocation5 + $0x220] sm:$0xff]
        %v344 = vld [vmem:[#allocation5 + $0x228] sm:$0xff]
        %v345 = vld [vmem:[#allocation5 + $0x230] sm:$0xff]
        %v346 = vld [vmem:[#allocation5 + $0x238] sm:$0xff]
        %v347 = vld [vmem:[#allocation5 + $0x240] sm:$0xff]
        %v348 = vld [vmem:[#allocation5 + $0x248] sm:$0xff]
        %v349 = vld [vmem:[#allocation5 + $0x250] sm:$0xff]
        %v350 = vld [vmem:[#allocation5 + $0x258] sm:$0xff]
        %v351 = vld [vmem:[#allocation5 + $0x260] sm:$0xff]
        %v352 = vld [vmem:[#allocation5 + $0x268] sm:$0xff]
        %v353 = vld [vmem:[#allocation5 + $0x270] sm:$0xff]
        %v354 = vld [vmem:[#allocation5 + $0x278] sm:$0xff]
        %v355 = vld [vmem:[#allocation5 + $0x280] sm:$0xff]
        %v356 = vld [vmem:[#allocation5 + $0x288] sm:$0xff]
        %v357 = vld [vmem:[#allocation5 + $0x290] sm:$0xff]
        %v358 = vld [vmem:[#allocation5 + $0x298] sm:$0xff]
        %v359 = vld [vmem:[#allocation5 + $0x2a0] sm:$0xff]
        %v360 = vld [vmem:[#allocation5 + $0x2a8] sm:$0xff]
        %v361 = vld [vmem:[#allocation5 + $0x2b0] sm:$0xff]
        %v362 = vld [vmem:[#allocation5 + $0x2b8] sm:$0xff]
        %v363 = vld [vmem:[#allocation5 + $0x2c0] sm:$0xff]
        %v364 = vld [vmem:[#allocation5 + $0x2c8] sm:$0xff]
        %v365 = vld [vmem:[#allocation5 + $0x2d0] sm:$0xff]
        %v366 = vld [vmem:[#allocation5 + $0x2d8] sm:$0xff]
        %v367 = vld [vmem:[#allocation5 + $0x2e0] sm:$0xff]
        %v368 = vld [vmem:[#allocation5 + $0x2e8] sm:$0xff]
        %v369 = vld [vmem:[#allocation5 + $0x2f0] sm:$0xff]
        %v370 = vld [vmem:[#allocation5 + $0x2f8] sm:$0xff]
        %v371 = vld [vmem:[#allocation5 + $0x300] sm:$0xff]
        %v372 = vld [vmem:[#allocation5 + $0x308] sm:$0xff]
        %v373 = vld [vmem:[#allocation5 + $0x310] sm:$0xff]
        %v374 = vld [vmem:[#allocation5 + $0x318] sm:$0xff]
        %v375 = vld [vmem:[#allocation5 + $0x320] sm:$0xff]
        %v376 = vld [vmem:[#allocation5 + $0x328] sm:$0xff]
        %v377 = vld [vmem:[#allocation5 + $0x330] sm:$0xff]
        %v378 = vld [vmem:[#allocation5 + $0x338] sm:$0xff]
        %v379 = vld [vmem:[#allocation5 + $0x340] sm:$0xff]
        %v380 = vld [vmem:[#allocation5 + $0x348] sm:$0xff]
        %v381 = vld [vmem:[#allocation5 + $0x350] sm:$0xff]
        %v382 = vld [vmem:[#allocation5 + $0x358] sm:$0xff]
        %v383 = vld [vmem:[#allocation5 + $0x360] sm:$0xff]
        %v384 = vld [vmem:[#allocation5 + $0x368] sm:$0xff]
        %v385 = vld [vmem:[#allocation5 + $0x370] sm:$0xff]
        %v386 = vld [vmem:[#allocation5 + $0x378] sm:$0xff]
        %v387 = vld [vmem:[%s2] sm:$0x3]
        %v389 = vlaneseq
        %v390 = vshrl.u32 %v389, 7
        %v391 = vsub.s32 0, %v390
        %v392 = vrot.slane %v387, %v391
        %v393 = vlaneseq
        %v394 = vshrl.u32 %v393, 7
        %v395 = vsub.s32 1, %v394
        %v396 = vrot.slane %v387, %v395
        %v403 = vunpack.c.l.b16 %v271
        %v404 = vunpack.c.h.b16 %v271
        %v405 = vunpack.c.l.b16 %v272
        %v406 = vunpack.c.h.b16 %v272
        %v407 = vunpack.c.l.b16 %v273
        %v408 = vunpack.c.h.b16 %v273
        %v409 = vunpack.c.l.b16 %v274
        %v410 = vpack.c.b16 %v403, %v403
        %v411 = vpack.c.b16 %v404, %v404
        %v412 = vpack.c.b16 %v405, %v405
        %v413 = vpack.c.b16 %v406, %v406
        %v414 = vpack.c.b16 %v407, %v407
        %v415 = vpack.c.b16 %v408, %v408
        %v416 = vpack.c.b16 %v409, %v409
        %v536 = vunpack.c.l.b16 %v275
        %v537 = vunpack.c.h.b16 %v275
        %v538 = vunpack.c.l.b16 %v276
        %v539 = vunpack.c.h.b16 %v276
        %v540 = vunpack.c.l.b16 %v277
        %v541 = vunpack.c.h.b16 %v277
        %v542 = vunpack.c.l.b16 %v278
        %v543 = vunpack.c.h.b16 %v278
        %v544 = vunpack.c.l.b16 %v279
        %v545 = vunpack.c.h.b16 %v279
        %v546 = vunpack.c.l.b16 %v280
        %v547 = vunpack.c.h.b16 %v280
        %v548 = vunpack.c.l.b16 %v281
        %v549 = vunpack.c.h.b16 %v281
        %v550 = vunpack.c.l.b16 %v282
        %v551 = vunpack.c.h.b16 %v282
        %v552 = vunpack.c.l.b16 %v283
        %v553 = vunpack.c.h.b16 %v283
        %v554 = vunpack.c.l.b16 %v284
        %v555 = vunpack.c.h.b16 %v284
        %v556 = vunpack.c.l.b16 %v285
        %v557 = vunpack.c.h.b16 %v285
        %v558 = vunpack.c.l.b16 %v286
        %v559 = vunpack.c.h.b16 %v286
        %v560 = vunpack.c.l.b16 %v287
        %v561 = vunpack.c.h.b16 %v287
        %v562 = vunpack.c.l.b16 %v288
        %v563 = vunpack.c.h.b16 %v288
        %v564 = vunpack.c.l.b16 %v289
        %v565 = vunpack.c.h.b16 %v289
        %v566 = vunpack.c.l.b16 %v290
        %v567 = vunpack.c.h.b16 %v290
        %v568 = vunpack.c.l.b16 %v291
        %v569 = vunpack.c.h.b16 %v291
        %v570 = vunpack.c.l.b16 %v292
        %v571 = vunpack.c.h.b16 %v292
        %v572 = vunpack.c.l.b16 %v293
        %v573 = vunpack.c.h.b16 %v293
        %v574 = vunpack.c.l.b16 %v294
        %v575 = vunpack.c.h.b16 %v294
        %v576 = vunpack.c.l.b16 %v295
        %v577 = vunpack.c.h.b16 %v295
        %v578 = vunpack.c.l.b16 %v296
        %v579 = vunpack.c.h.b16 %v296
        %v580 = vunpack.c.l.b16 %v297
        %v581 = vunpack.c.h.b16 %v297
        %v582 = vunpack.c.l.b16 %v298
        %v583 = vunpack.c.h.b16 %v298
        %v584 = vunpack.c.l.b16 %v299
        %v585 = vunpack.c.h.b16 %v299
        %v586 = vunpack.c.l.b16 %v300
        %v587 = vunpack.c.h.b16 %v300
        %v588 = vunpack.c.l.b16 %v301
        %v589 = vunpack.c.h.b16 %v301
        %v590 = vunpack.c.l.b16 %v302
        %v591 = vunpack.c.h.b16 %v302
        %v592 = vunpack.c.l.b16 %v303
        %v593 = vunpack.c.h.b16 %v303
        %v594 = vunpack.c.l.b16 %v304
        %v595 = vunpack.c.h.b16 %v304
        %v596 = vunpack.c.l.b16 %v305
        %v597 = vunpack.c.h.b16 %v305
        %v598 = vunpack.c.l.b16 %v306
        %v599 = vunpack.c.h.b16 %v306
        %v600 = vunpack.c.l.b16 %v307
        %v601 = vunpack.c.h.b16 %v307
        %v602 = vunpack.c.l.b16 %v308
        %v603 = vunpack.c.h.b16 %v308
        %v604 = vunpack.c.l.b16 %v309
        %v605 = vunpack.c.h.b16 %v309
        %v606 = vunpack.c.l.b16 %v310
        %v607 = vunpack.c.h.b16 %v310
        %v608 = vunpack.c.l.b16 %v311
        %v609 = vunpack.c.h.b16 %v311
        %v610 = vunpack.c.l.b16 %v312
        %v611 = vunpack.c.h.b16 %v312
        %v612 = vunpack.c.l.b16 %v313
        %v613 = vunpack.c.h.b16 %v313
        %v614 = vunpack.c.l.b16 %v314
        %v615 = vunpack.c.h.b16 %v314
        %v616 = vunpack.c.l.b16 %v315
        %v617 = vunpack.c.h.b16 %v315
        %v618 = vunpack.c.l.b16 %v316
        %v619 = vunpack.c.h.b16 %v316
        %v620 = vunpack.c.l.b16 %v317
        %v621 = vunpack.c.h.b16 %v317
        %v622 = vunpack.c.l.b16 %v318
        %v623 = vunpack.c.h.b16 %v318
        %v624 = vunpack.c.l.b16 %v319
        %v625 = vunpack.c.h.b16 %v319
        %v626 = vunpack.c.l.b16 %v320
        %v627 = vunpack.c.h.b16 %v320
        %v628 = vunpack.c.l.b16 %v321
        %v629 = vunpack.c.h.b16 %v321
        %v630 = vunpack.c.l.b16 %v322
        %v631 = vunpack.c.h.b16 %v322
        %v632 = vunpack.c.l.b16 %v323
        %v633 = vunpack.c.h.b16 %v323
        %v634 = vunpack.c.l.b16 %v324
        %v635 = vunpack.c.h.b16 %v324
        %v636 = vunpack.c.l.b16 %v325
        %v637 = vunpack.c.h.b16 %v325
        %v638 = vunpack.c.l.b16 %v326
        %v639 = vunpack.c.h.b16 %v326
        %v640 = vunpack.c.l.b16 %v327
        %v641 = vunpack.c.h.b16 %v327
        %v642 = vunpack.c.l.b16 %v328
        %v643 = vunpack.c.h.b16 %v328
        %v644 = vunpack.c.l.b16 %v329
        %v645 = vunpack.c.h.b16 %v329
        %v646 = vunpack.c.l.b16 %v330
        %v647 = vunpack.c.h.b16 %v330
        %v648 = vunpack.c.l.b16 %v331
        %v649 = vunpack.c.h.b16 %v331
        %v650 = vunpack.c.l.b16 %v332
        %v651 = vunpack.c.h.b16 %v332
        %v652 = vunpack.c.l.b16 %v333
        %v653 = vunpack.c.h.b16 %v333
        %v654 = vunpack.c.l.b16 %v334
        %v655 = vunpack.c.h.b16 %v334
        %v656 = vunpack.c.l.b16 %v335
        %v657 = vunpack.c.h.b16 %v335
        %v658 = vunpack.c.l.b16 %v336
        %v659 = vunpack.c.h.b16 %v336
        %v660 = vunpack.c.l.b16 %v337
        %v661 = vunpack.c.h.b16 %v337
        %v662 = vunpack.c.l.b16 %v338
        %v663 = vunpack.c.h.b16 %v338
        %v664 = vunpack.c.l.b16 %v339
        %v665 = vunpack.c.h.b16 %v339
        %v666 = vunpack.c.l.b16 %v340
        %v667 = vunpack.c.h.b16 %v340
        %v668 = vunpack.c.l.b16 %v341
        %v669 = vunpack.c.h.b16 %v341
        %v670 = vunpack.c.l.b16 %v342
        %v671 = vunpack.c.h.b16 %v342
        %v672 = vunpack.c.l.b16 %v343
        %v673 = vunpack.c.h.b16 %v343
        %v674 = vunpack.c.l.b16 %v344
        %v675 = vunpack.c.h.b16 %v344
        %v676 = vunpack.c.l.b16 %v345
        %v677 = vunpack.c.h.b16 %v345
        %v678 = vunpack.c.l.b16 %v346
        %v679 = vunpack.c.h.b16 %v346
        %v680 = vunpack.c.l.b16 %v347
        %v681 = vunpack.c.h.b16 %v347
        %v682 = vunpack.c.l.b16 %v348
        %v683 = vunpack.c.h.b16 %v348
        %v684 = vunpack.c.l.b16 %v349
        %v685 = vunpack.c.h.b16 %v349
        %v686 = vunpack.c.l.b16 %v350
        %v687 = vunpack.c.h.b16 %v350
        %v688 = vunpack.c.l.b16 %v351
        %v689 = vunpack.c.h.b16 %v351
        %v690 = vunpack.c.l.b16 %v352
        %v691 = vunpack.c.h.b16 %v352
        %v692 = vunpack.c.l.b16 %v353
        %v693 = vunpack.c.h.b16 %v353
        %v694 = vunpack.c.l.b16 %v354
        %v695 = vunpack.c.h.b16 %v354
        %v696 = vunpack.c.l.b16 %v355
        %v697 = vunpack.c.h.b16 %v355
        %v698 = vunpack.c.l.b16 %v356
        %v699 = vunpack.c.h.b16 %v356
        %v700 = vunpack.c.l.b16 %v357
        %v701 = vunpack.c.h.b16 %v357
        %v702 = vunpack.c.l.b16 %v358
        %v703 = vunpack.c.h.b16 %v358
        %v704 = vunpack.c.l.b16 %v359
        %v705 = vunpack.c.h.b16 %v359
        %v706 = vunpack.c.l.b16 %v360
        %v707 = vunpack.c.h.b16 %v360
        %v708 = vunpack.c.l.b16 %v361
        %v709 = vunpack.c.h.b16 %v361
        %v710 = vunpack.c.l.b16 %v362
        %v711 = vunpack.c.h.b16 %v362
        %v712 = vunpack.c.l.b16 %v363
        %v713 = vunpack.c.h.b16 %v363
        %v714 = vunpack.c.l.b16 %v364
        %v715 = vunpack.c.h.b16 %v364
        %v716 = vunpack.c.l.b16 %v365
        %v717 = vunpack.c.h.b16 %v365
        %v718 = vunpack.c.l.b16 %v366
        %v719 = vunpack.c.h.b16 %v366
        %v720 = vunpack.c.l.b16 %v367
        %v721 = vunpack.c.h.b16 %v367
        %v722 = vunpack.c.l.b16 %v368
        %v723 = vunpack.c.h.b16 %v368
        %v724 = vunpack.c.l.b16 %v369
        %v725 = vunpack.c.h.b16 %v369
        %v726 = vunpack.c.l.b16 %v370
        %v727 = vunpack.c.h.b16 %v370
        %v728 = vunpack.c.l.b16 %v371
        %v729 = vunpack.c.h.b16 %v371
        %v730 = vunpack.c.l.b16 %v372
        %v731 = vunpack.c.h.b16 %v372
        %v732 = vunpack.c.l.b16 %v373
        %v733 = vunpack.c.h.b16 %v373
        %v734 = vunpack.c.l.b16 %v374
        %v735 = vunpack.c.h.b16 %v374
        %v736 = vunpack.c.l.b16 %v375
        %v737 = vunpack.c.h.b16 %v375
        %v738 = vunpack.c.l.b16 %v376
        %v739 = vunpack.c.h.b16 %v376
        %v740 = vunpack.c.l.b16 %v377
        %v741 = vunpack.c.h.b16 %v377
        %v742 = vunpack.c.l.b16 %v378
        %v743 = vunpack.c.h.b16 %v378
        %v744 = vunpack.c.l.b16 %v379
        %v745 = vunpack.c.h.b16 %v379
        %v746 = vunpack.c.l.b16 %v380
        %v747 = vunpack.c.h.b16 %v380
        %v748 = vunpack.c.l.b16 %v381
        %v749 = vunpack.c.h.b16 %v381
        %v750 = vunpack.c.l.b16 %v382
        %v751 = vunpack.c.h.b16 %v382
        %v752 = vunpack.c.l.b16 %v383
        %v753 = vunpack.c.h.b16 %v383
        %v754 = vunpack.c.l.b16 %v384
        %v755 = vunpack.c.h.b16 %v384
        %v756 = vunpack.c.l.b16 %v385
        %v757 = vunpack.c.h.b16 %v385
        %v758 = vunpack.c.l.b16 %v386
        %v759 = vunpack.c.h.b16 %v386
        %v760 = vpack.c.b16 %v538, %v536
        %v761 = vpack.c.b16 %v539, %v537
        %v762 = vpack.c.b16 %v542, %v540
        %v763 = vpack.c.b16 %v543, %v541
        %v764 = vpack.c.b16 %v546, %v544
        %v765 = vpack.c.b16 %v547, %v545
        %v766 = vpack.c.b16 %v550, %v548
        %v767 = vpack.c.b16 %v551, %v549
        %v768 = vpack.c.b16 %v554, %v552
        %v769 = vpack.c.b16 %v555, %v553
        %v770 = vpack.c.b16 %v558, %v556
        %v771 = vpack.c.b16 %v559, %v557
        %v772 = vpack.c.b16 %v562, %v560
        %v773 = vpack.c.b16 %v563, %v561
        %v774 = vpack.c.b16 %v566, %v564
        %v775 = vpack.c.b16 %v567, %v565
        %v776 = vpack.c.b16 %v570, %v568
        %v777 = vpack.c.b16 %v571, %v569
        %v778 = vpack.c.b16 %v574, %v572
        %v779 = vpack.c.b16 %v575, %v573
        %v780 = vpack.c.b16 %v578, %v576
        %v781 = vpack.c.b16 %v579, %v577
        %v782 = vpack.c.b16 %v582, %v580
        %v783 = vpack.c.b16 %v583, %v581
        %v784 = vpack.c.b16 %v586, %v584
        %v785 = vpack.c.b16 %v587, %v585
        %v786 = vpack.c.b16 %v590, %v588
        %v787 = vpack.c.b16 %v591, %v589
        %v788 = vpack.c.b16 %v594, %v592
        %v789 = vpack.c.b16 %v595, %v593
        %v790 = vpack.c.b16 %v598, %v596
        %v791 = vpack.c.b16 %v599, %v597
        %v792 = vpack.c.b16 %v602, %v600
        %v793 = vpack.c.b16 %v603, %v601
        %v794 = vpack.c.b16 %v606, %v604
        %v795 = vpack.c.b16 %v607, %v605
        %v796 = vpack.c.b16 %v610, %v608
        %v797 = vpack.c.b16 %v611, %v609
        %v798 = vpack.c.b16 %v614, %v612
        %v799 = vpack.c.b16 %v615, %v613
        %v800 = vpack.c.b16 %v618, %v616
        %v801 = vpack.c.b16 %v619, %v617
        %v802 = vpack.c.b16 %v622, %v620
        %v803 = vpack.c.b16 %v623, %v621
        %v804 = vpack.c.b16 %v626, %v624
        %v805 = vpack.c.b16 %v627, %v625
        %v806 = vpack.c.b16 %v630, %v628
        %v807 = vpack.c.b16 %v631, %v629
        %v808 = vpack.c.b16 %v634, %v632
        %v809 = vpack.c.b16 %v635, %v633
        %v810 = vpack.c.b16 %v638, %v636
        %v811 = vpack.c.b16 %v639, %v637
        %v812 = vpack.c.b16 %v642, %v640
        %v813 = vpack.c.b16 %v643, %v641
        %v814 = vpack.c.b16 %v646, %v644
        %v815 = vpack.c.b16 %v647, %v645
        %v816 = vpack.c.b16 %v650, %v648
        %v817 = vpack.c.b16 %v651, %v649
        %v818 = vpack.c.b16 %v654, %v652
        %v819 = vpack.c.b16 %v655, %v653
        %v820 = vpack.c.b16 %v658, %v656
        %v821 = vpack.c.b16 %v659, %v657
        %v822 = vpack.c.b16 %v662, %v660
        %v823 = vpack.c.b16 %v663, %v661
        %v824 = vpack.c.b16 %v666, %v664
        %v825 = vpack.c.b16 %v667, %v665
        %v826 = vpack.c.b16 %v670, %v668
        %v827 = vpack.c.b16 %v671, %v669
        %v828 = vpack.c.b16 %v674, %v672
        %v829 = vpack.c.b16 %v675, %v673
        %v830 = vpack.c.b16 %v678, %v676
        %v831 = vpack.c.b16 %v679, %v677
        %v832 = vpack.c.b16 %v682, %v680
        %v833 = vpack.c.b16 %v683, %v681
        %v834 = vpack.c.b16 %v686, %v684
        %v835 = vpack.c.b16 %v687, %v685
        %v836 = vpack.c.b16 %v690, %v688
        %v837 = vpack.c.b16 %v691, %v689
        %v838 = vpack.c.b16 %v694, %v692
        %v839 = vpack.c.b16 %v695, %v693
        %v840 = vpack.c.b16 %v698, %v696
        %v841 = vpack.c.b16 %v699, %v697
        %v842 = vpack.c.b16 %v702, %v700
        %v843 = vpack.c.b16 %v703, %v701
        %v844 = vpack.c.b16 %v706, %v704
        %v845 = vpack.c.b16 %v707, %v705
        %v846 = vpack.c.b16 %v710, %v708
        %v847 = vpack.c.b16 %v711, %v709
        %v848 = vpack.c.b16 %v714, %v712
        %v849 = vpack.c.b16 %v715, %v713
        %v850 = vpack.c.b16 %v718, %v716
        %v851 = vpack.c.b16 %v719, %v717
        %v852 = vpack.c.b16 %v722, %v720
        %v853 = vpack.c.b16 %v723, %v721
        %v854 = vpack.c.b16 %v726, %v724
        %v855 = vpack.c.b16 %v727, %v725
        %v856 = vpack.c.b16 %v730, %v728
        %v857 = vpack.c.b16 %v731, %v729
        %v858 = vpack.c.b16 %v734, %v732
        %v859 = vpack.c.b16 %v735, %v733
        %v860 = vpack.c.b16 %v738, %v736
        %v861 = vpack.c.b16 %v739, %v737
        %v862 = vpack.c.b16 %v742, %v740
        %v863 = vpack.c.b16 %v743, %v741
        %v864 = vpack.c.b16 %v746, %v744
        %v865 = vpack.c.b16 %v747, %v745
        %v866 = vpack.c.b16 %v750, %v748
        %v867 = vpack.c.b16 %v751, %v749
        %v868 = vpack.c.b16 %v754, %v752
        %v869 = vpack.c.b16 %v755, %v753
        %v870 = vpack.c.b16 %v758, %v756
        %v871 = vpack.c.b16 %v759, %v757
        %984 = vmatprep.subr.bf16.mxu0 %v775
        %985 = vmatpush1.bf16.msra.mxu0 %v774
        %986 = vmatprep.subr.bf16.mxu0 %v773
        %987 = vmatpush1.bf16.msra.mxu0 %v772
        %988 = vmatprep.subr.bf16.mxu0 %v771
        %989 = vmatpush1.bf16.msra.mxu0 %v770
        %990 = vmatprep.subr.bf16.mxu0 %v769
        %991 = vmatpush1.bf16.msra.mxu0 %v768
        %992 = vmatprep.subr.bf16.mxu0 %v767
        %993 = vmatpush1.bf16.msra.mxu0 %v766
        %994 = vmatprep.subr.bf16.mxu0 %v765
        %995 = vmatpush1.bf16.msra.mxu0 %v764
        %996 = vmatprep.subr.bf16.mxu0 %v763
        %997 = vmatpush1.bf16.msra.mxu0 %v762
        %998 = vmatprep.subr.bf16.mxu0 %v761
        %999 = vmatpush1.bf16.msra.mxu0 %v760
        %1000 = vmatprep.subr.bf16.mxu0 %v791
        %1001 = vmatpush2.bf16.msra.mxu0 %v790
        %1002 = vmatprep.subr.bf16.mxu0 %v789
        %1003 = vmatpush2.bf16.msra.mxu0 %v788
        %1004 = vmatprep.subr.bf16.mxu0 %v787
        %1005 = vmatpush2.bf16.msra.mxu0 %v786
        %1006 = vmatprep.subr.bf16.mxu0 %v785
        %1007 = vmatpush2.bf16.msra.mxu0 %v784
        %1008 = vmatprep.subr.bf16.mxu0 %v783
        %1009 = vmatpush2.bf16.msra.mxu0 %v782
        %1010 = vmatprep.subr.bf16.mxu0 %v781
        %1011 = vmatpush2.bf16.msra.mxu0 %v780
        %1012 = vmatprep.subr.bf16.mxu0 %v779
        %1013 = vmatpush2.bf16.msra.mxu0 %v778
        %1014 = vmatprep.subr.bf16.mxu0 %v777
        %1015 = vmatpush2.bf16.msra.mxu0 %v776
        %1016 = vmatprep.mubr.bf16.mxu0 %v411
        %1017 = vmatmul.mubr.bf16.gmra.mxu0 %v410
        %v1018 = vpop.f32.mrf.mxu0
        %v1019 = vadd.f32 %v392, %v1018
        %v1020 = vpop.f32.mrf.mxu0
        %v1021 = vadd.f32 %v396, %v1020
        %v1022 = vpop.f32.mrf.mxu0
        %v1023 = vpop.f32.mrf.mxu0
        %1024 = vdwg.mxu0
        %1025 = vmatprep.subr.bf16.mxu0 %v807
        %1026 = vmatpush1.bf16.msra.mxu0 %v806
        %1027 = vmatprep.subr.bf16.mxu0 %v805
        %1028 = vmatpush1.bf16.msra.mxu0 %v804
        %1029 = vmatprep.subr.bf16.mxu0 %v803
        %1030 = vmatpush1.bf16.msra.mxu0 %v802
        %1031 = vmatprep.subr.bf16.mxu0 %v801
        %1032 = vmatpush1.bf16.msra.mxu0 %v800
        %1033 = vmatprep.subr.bf16.mxu0 %v799
        %1034 = vmatpush1.bf16.msra.mxu0 %v798
        %1035 = vmatprep.subr.bf16.mxu0 %v797
        %1036 = vmatpush1.bf16.msra.mxu0 %v796
        %1037 = vmatprep.subr.bf16.mxu0 %v795
        %1038 = vmatpush1.bf16.msra.mxu0 %v794
        %1039 = vmatprep.subr.bf16.mxu0 %v793
        %1040 = vmatpush1.bf16.msra.mxu0 %v792
        %1041 = vmatprep.subr.bf16.mxu0 %v823
        %1042 = vmatpush2.bf16.msra.mxu0 %v822
        %1043 = vmatprep.subr.bf16.mxu0 %v821
        %1044 = vmatpush2.bf16.msra.mxu0 %v820
        %1045 = vmatprep.subr.bf16.mxu0 %v819
        %1046 = vmatpush2.bf16.msra.mxu0 %v818
        %1047 = vmatprep.subr.bf16.mxu0 %v817
        %1048 = vmatpush2.bf16.msra.mxu0 %v816
        %1049 = vmatprep.subr.bf16.mxu0 %v815
        %1050 = vmatpush2.bf16.msra.mxu0 %v814
        %1051 = vmatprep.subr.bf16.mxu0 %v813
        %1052 = vmatpush2.bf16.msra.mxu0 %v812
        %1053 = vmatprep.subr.bf16.mxu0 %v811
        %1054 = vmatpush2.bf16.msra.mxu0 %v810
        %1055 = vmatprep.subr.bf16.mxu0 %v809
        %1056 = vmatpush2.bf16.msra.mxu0 %v808
        %1057 = vmatprep.mubr.bf16.mxu0 %v413
        %1058 = vmatmul.mubr.bf16.gmra.mxu0 %v412
        %v1059 = vpop.f32.mrf.mxu0
        %v1060 = vadd.f32 %v1019, %v1059
        %v1061 = vpop.f32.mrf.mxu0
        %v1062 = vadd.f32 %v1021, %v1061
        %v1063 = vpop.f32.mrf.mxu0
        %v1064 = vpop.f32.mrf.mxu0
        %1065 = vdwg.mxu0
        %1066 = vmatprep.subr.bf16.mxu0 %v839
        %1067 = vmatpush1.bf16.msra.mxu0 %v838
        %1068 = vmatprep.subr.bf16.mxu0 %v837
        %1069 = vmatpush1.bf16.msra.mxu0 %v836
        %1070 = vmatprep.subr.bf16.mxu0 %v835
        %1071 = vmatpush1.bf16.msra.mxu0 %v834
        %1072 = vmatprep.subr.bf16.mxu0 %v833
        %1073 = vmatpush1.bf16.msra.mxu0 %v832
        %1074 = vmatprep.subr.bf16.mxu0 %v831
        %1075 = vmatpush1.bf16.msra.mxu0 %v830
        %1076 = vmatprep.subr.bf16.mxu0 %v829
        %1077 = vmatpush1.bf16.msra.mxu0 %v828
        %1078 = vmatprep.subr.bf16.mxu0 %v827
        %1079 = vmatpush1.bf16.msra.mxu0 %v826
        %1080 = vmatprep.subr.bf16.mxu0 %v825
        %1081 = vmatpush1.bf16.msra.mxu0 %v824
        %1082 = vmatprep.subr.bf16.mxu0 %v855
        %1083 = vmatpush2.bf16.msra.mxu0 %v854
        %1084 = vmatprep.subr.bf16.mxu0 %v853
        %1085 = vmatpush2.bf16.msra.mxu0 %v852
        %1086 = vmatprep.subr.bf16.mxu0 %v851
        %1087 = vmatpush2.bf16.msra.mxu0 %v850
        %1088 = vmatprep.subr.bf16.mxu0 %v849
        %1089 = vmatpush2.bf16.msra.mxu0 %v848
        %1090 = vmatprep.subr.bf16.mxu0 %v847
        %1091 = vmatpush2.bf16.msra.mxu0 %v846
        %1092 = vmatprep.subr.bf16.mxu0 %v845
        %1093 = vmatpush2.bf16.msra.mxu0 %v844
        %1094 = vmatprep.subr.bf16.mxu0 %v843
        %1095 = vmatpush2.bf16.msra.mxu0 %v842
        %1096 = vmatprep.subr.bf16.mxu0 %v841
        %1097 = vmatpush2.bf16.msra.mxu0 %v840
        %1098 = vmatprep.mubr.bf16.mxu0 %v415
        %1099 = vmatmul.mubr.bf16.gmra.mxu0 %v414
        %v1100 = vpop.f32.mrf.mxu0
        %v1101 = vadd.f32 %v1060, %v1100
        %v1102 = vpop.f32.mrf.mxu0
        %v1103 = vadd.f32 %v1062, %v1102
        %v1104 = vpop.f32.mrf.mxu0
        %v1105 = vpop.f32.mrf.mxu0
        %1106 = vdwg.mxu0
        %1107 = vmatprep.subr.bf16.mxu0 %v871
        %1108 = vmatpush1.bf16.msra.mxu0 %v870
        %1109 = vmatprep.subr.bf16.mxu0 %v869
        %1110 = vmatpush1.bf16.msra.mxu0 %v868
        %1111 = vmatprep.subr.bf16.mxu0 %v867
        %1112 = vmatpush1.bf16.msra.mxu0 %v866
        %1113 = vmatprep.subr.bf16.mxu0 %v865
        %1114 = vmatpush1.bf16.msra.mxu0 %v864
        %1115 = vmatprep.subr.bf16.mxu0 %v863
        %1116 = vmatpush1.bf16.msra.mxu0 %v862
        %1117 = vmatprep.subr.bf16.mxu0 %v861
        %1118 = vmatpush1.bf16.msra.mxu0 %v860
        %1119 = vmatprep.subr.bf16.mxu0 %v859
        %1120 = vmatpush1.bf16.msra.mxu0 %v858
        %1121 = vmatprep.subr.bf16.mxu0 %v857
        %1122 = vmatpush1.bf16.msra.mxu0 %v856
        %1123 = vmatprep.subr.bf16.mxu0 0
        %1124 = vmatpush2.bf16.msra.mxu0 0
        %1125 = vmatprep.subr.bf16.mxu0 0
        %1126 = vmatpush2.bf16.msra.mxu0 0
        %1127 = vmatprep.subr.bf16.mxu0 0
        %1128 = vmatpush2.bf16.msra.mxu0 0
        %1129 = vmatprep.subr.bf16.mxu0 0
        %1130 = vmatpush2.bf16.msra.mxu0 0
        %1131 = vmatprep.subr.bf16.mxu0 0
        %1132 = vmatpush2.bf16.msra.mxu0 0
        %1133 = vmatprep.subr.bf16.mxu0 0
        %1134 = vmatpush2.bf16.msra.mxu0 0
        %1135 = vmatprep.subr.bf16.mxu0 0
        %1136 = vmatpush2.bf16.msra.mxu0 0
        %1137 = vmatprep.subr.bf16.mxu0 0
        %1138 = vmatpush2.bf16.msra.mxu0 0
        %1139 = vmatprep.mubr.bf16.mxu0 0
        %1140 = vmatmul.mubr.bf16.gmra.mxu0 %v416
        %v1141 = vpop.f32.mrf.mxu0
        %v1142 = vadd.f32 %v1101, %v1141
        %v1143 = vpop.f32.mrf.mxu0
        %v1144 = vadd.f32 %v1103, %v1143
        %v1145 = vpop.f32.mrf.mxu0
        %v1146 = vpop.f32.mrf.mxu0
        %1147 = vdwg.mxu0
        %v1148 = vmax.f32 %v1142, 0.0
        %v1149 = vmax.f32 %v1144, 0.0
        %v1150 = vpack.c.bf16 %v1148, %v1148
        %v1151 = vpack.c.bf16 %v1149, %v1149
        %v1152 = vld [vmem:[#allocation7] sm:$0xf]
        %v1153 = vld [vmem:[#allocation7 + $0x4] sm:$0xf]
        %v1154 = vld [vmem:[#allocation7 + $0x8] sm:$0xf]
        %v1155 = vld [vmem:[#allocation7 + $0xc] sm:$0xf]
        %v1156 = vld [vmem:[#allocation7 + $0x10] sm:$0xf]
        %v1157 = vld [vmem:[#allocation7 + $0x14] sm:$0xf]
        %v1158 = vld [vmem:[#allocation7 + $0x18] sm:$0xf]
        %v1159 = vld [vmem:[#allocation7 + $0x1c] sm:$0xf]
        %v1160 = vld [vmem:[#allocation7 + $0x20] sm:$0xf]
        %v1161 = vld [vmem:[#allocation7 + $0x24] sm:$0xf]
        %v1162 = vld [vmem:[#allocation7 + $0x28] sm:$0xf]
        %v1163 = vld [vmem:[#allocation7 + $0x2c] sm:$0xf]
        %v1164 = vld [vmem:[#allocation7 + $0x30] sm:$0xf]
        %v1165 = vld [vmem:[#allocation7 + $0x34] sm:$0xf]
        %v1166 = vld [vmem:[#allocation7 + $0x38] sm:$0xf]
        %v1167 = vld [vmem:[#allocation7 + $0x3c] sm:$0xf]
        %v1168 = vld [vmem:[#allocation7 + $0x40] sm:$0xf]
        %v1169 = vld [vmem:[#allocation7 + $0x44] sm:$0xf]
        %v1170 = vld [vmem:[#allocation7 + $0x48] sm:$0xf]
        %v1171 = vld [vmem:[#allocation7 + $0x4c] sm:$0xf]
        %v1172 = vld [vmem:[#allocation7 + $0x50] sm:$0xf]
        %v1173 = vld [vmem:[#allocation7 + $0x54] sm:$0xf]
        %v1174 = vld [vmem:[#allocation7 + $0x58] sm:$0xf]
        %v1175 = vld [vmem:[#allocation7 + $0x5c] sm:$0xf]
        %v1176 = vld [vmem:[#allocation7 + $0x60] sm:$0xf]
        %v1177 = vld [vmem:[#allocation7 + $0x64] sm:$0xf]
        %v1178 = vld [vmem:[#allocation7 + $0x68] sm:$0xf]
        %v1179 = vld [vmem:[#allocation7 + $0x6c] sm:$0xf]
        %v1180 = vld [vmem:[#allocation7 + $0x70] sm:$0xf]
        %v1181 = vld [vmem:[#allocation7 + $0x74] sm:$0xf]
        %v1182 = vld [vmem:[#allocation7 + $0x78] sm:$0xf]
        %v1183 = vld [vmem:[#allocation7 + $0x7c] sm:$0xf]
        %v1184 = vld [vmem:[%s4] sm:$0x1]
        %v1186 = vlaneseq
        %v1187 = vshrl.u32 %v1186, 7
        %v1188 = vsub.s32 0, %v1187
        %v1189 = vrot.slane %v1184, %v1188
        %v1223 = vunpack.c.l.b16 %v1152
        %v1224 = vunpack.c.l.b16 %v1153
        %v1225 = vunpack.c.l.b16 %v1154
        %v1226 = vunpack.c.l.b16 %v1155
        %v1227 = vunpack.c.l.b16 %v1156
        %v1228 = vunpack.c.l.b16 %v1157
        %v1229 = vunpack.c.l.b16 %v1158
        %v1230 = vunpack.c.l.b16 %v1159
        %v1231 = vunpack.c.l.b16 %v1160
        %v1232 = vunpack.c.l.b16 %v1161
        %v1233 = vunpack.c.l.b16 %v1162
        %v1234 = vunpack.c.l.b16 %v1163
        %v1235 = vunpack.c.l.b16 %v1164
        %v1236 = vunpack.c.l.b16 %v1165
        %v1237 = vunpack.c.l.b16 %v1166
        %v1238 = vunpack.c.l.b16 %v1167
        %v1239 = vunpack.c.l.b16 %v1168
        %v1240 = vunpack.c.l.b16 %v1169
        %v1241 = vunpack.c.l.b16 %v1170
        %v1242 = vunpack.c.l.b16 %v1171
        %v1243 = vunpack.c.l.b16 %v1172
        %v1244 = vunpack.c.l.b16 %v1173
        %v1245 = vunpack.c.l.b16 %v1174
        %v1246 = vunpack.c.l.b16 %v1175
        %v1247 = vunpack.c.l.b16 %v1176
        %v1248 = vunpack.c.l.b16 %v1177
        %v1249 = vunpack.c.l.b16 %v1178
        %v1250 = vunpack.c.l.b16 %v1179
        %v1251 = vunpack.c.l.b16 %v1180
        %v1252 = vunpack.c.l.b16 %v1181
        %v1253 = vunpack.c.l.b16 %v1182
        %v1254 = vunpack.c.l.b16 %v1183
        %v1255 = vpack.c.b16 %v1224, %v1223
        %v1256 = vpack.c.b16 %v1226, %v1225
        %v1257 = vpack.c.b16 %v1228, %v1227
        %v1258 = vpack.c.b16 %v1230, %v1229
        %v1259 = vpack.c.b16 %v1232, %v1231
        %v1260 = vpack.c.b16 %v1234, %v1233
        %v1261 = vpack.c.b16 %v1236, %v1235
        %v1262 = vpack.c.b16 %v1238, %v1237
        %v1263 = vpack.c.b16 %v1240, %v1239
        %v1264 = vpack.c.b16 %v1242, %v1241
        %v1265 = vpack.c.b16 %v1244, %v1243
        %v1266 = vpack.c.b16 %v1246, %v1245
        %v1267 = vpack.c.b16 %v1248, %v1247
        %v1268 = vpack.c.b16 %v1250, %v1249
        %v1269 = vpack.c.b16 %v1252, %v1251
        %v1270 = vpack.c.b16 %v1254, %v1253
        %1287 = vmatprep.subr.bf16.mxu0 0
        %1288 = vmatpush1.bf16.msra.mxu0 %v1262
        %1289 = vmatprep.subr.bf16.mxu0 0
        %1290 = vmatpush1.bf16.msra.mxu0 %v1261
        %1291 = vmatprep.subr.bf16.mxu0 0
        %1292 = vmatpush1.bf16.msra.mxu0 %v1260
        %1293 = vmatprep.subr.bf16.mxu0 0
        %1294 = vmatpush1.bf16.msra.mxu0 %v1259
        %1295 = vmatprep.subr.bf16.mxu0 0
        %1296 = vmatpush1.bf16.msra.mxu0 %v1258
        %1297 = vmatprep.subr.bf16.mxu0 0
        %1298 = vmatpush1.bf16.msra.mxu0 %v1257
        %1299 = vmatprep.subr.bf16.mxu0 0
        %1300 = vmatpush1.bf16.msra.mxu0 %v1256
        %1301 = vmatprep.subr.bf16.mxu0 0
        %1302 = vmatpush1.bf16.msra.mxu0 %v1255
        %1303 = vmatprep.subr.bf16.mxu0 0
        %1304 = vmatpush2.bf16.msra.mxu0 %v1270
        %1305 = vmatprep.subr.bf16.mxu0 0
        %1306 = vmatpush2.bf16.msra.mxu0 %v1269
        %1307 = vmatprep.subr.bf16.mxu0 0
        %1308 = vmatpush2.bf16.msra.mxu0 %v1268
        %1309 = vmatprep.subr.bf16.mxu0 0
        %1310 = vmatpush2.bf16.msra.mxu0 %v1267
        %1311 = vmatprep.subr.bf16.mxu0 0
        %1312 = vmatpush2.bf16.msra.mxu0 %v1266
        %1313 = vmatprep.subr.bf16.mxu0 0
        %1314 = vmatpush2.bf16.msra.mxu0 %v1265
        %1315 = vmatprep.subr.bf16.mxu0 0
        %1316 = vmatpush2.bf16.msra.mxu0 %v1264
        %1317 = vmatprep.subr.bf16.mxu0 0
        %1318 = vmatpush2.bf16.msra.mxu0 %v1263
        %1319 = vmatprep.mubr.bf16.mxu0 %v1151
        %1320 = vmatmul.mubr.bf16.gmra.mxu0 %v1150
        %v1321 = vpop.f32.mrf.mxu0
        %v1322 = vadd.f32 %v1189, %v1321
        %v1323 = vpop.f32.mrf.mxu0
        %v1324 = vpop.f32.mrf.mxu0
        %v1325 = vpop.f32.mrf.mxu0
        %1326 = vdwg.mxu0
        %1327 = vst [vmem:[%s269] sm:$0xff] %v1322
        %s1328 = sand.u32 %s141, 1
        %s1329 = scalar_lea.sflag [#allocation4], %s1328
        %s1330 = sand.u32 %s141, 1
        %s1331 = smul.addr %s1330, 8
        %s1332 = scalar_lea.vmem [#allocation8], %s1331
        // Predicated region
        $region53: #{tpu_custom_call.1} parent=39 // pred_check
          %p1333 = pneg %p151
        $region54: #{tpu_custom_call.1} parent=39 // pred_check_branch
          %1335 = sbr.rel (%p1333) target = $region56
        $region55: #{tpu_custom_call.1} parent=39 // pred_region
          %s1337 = ssub.s32 128, 128
          %1338 = vsyncadd %s1329, %s1337
          %s1339 = smul.addr %s23, 128
          %s1340 = scalar_lea.hbm %s5, %s1339
          %s1342 = sshll.u32 %s1332, 4
          %s1343 = int_to_ptr.vmem [resolvable:$true] %s1342
          %1345 = dma.vmem_to_hbm [thread:$0]  %s1343, 128, %s1340, %s1329
        $region56: #{tpu_custom_call.1} parent=39 // pred_fallthru
          _
      $region40: #{tpu_custom_call.1} parent=5 // pred_fallthru
        _
      %p1346 = scmp.le.s32.totalorder 2, %s18
      // Predicated region
      $region57: #{tpu_custom_call.1} parent=5 // pred_check
        %p1347 = pneg %p1346
      $region58: #{tpu_custom_call.1} parent=5 // pred_check_branch
        %1349 = sbr.rel (%p1347) target = $region60
      $region59: #{tpu_custom_call.1} parent=5 // pred_region
        %s1350 = ssub.s32 %s18, 2
        // Predicated region
        $region61: #{tpu_custom_call.1} parent=59 // pred_check
          %p1351 = pneg %p157
        $region62: #{tpu_custom_call.1} parent=59 // pred_check_branch
          %1353 = sbr.rel (%p1351) target = $region64
        $region63: #{tpu_custom_call.1} parent=59 // pred_region
          %s1354 = sand.u32 %s142, 1
          %s1355 = scalar_lea.sflag [#allocation4], %s1354
          %s1356 = sand.u32 %s142, 1
          %s1357 = smul.addr %s1356, 8
          %s1358 = scalar_lea.vmem [#allocation8], %s1357
          %1359 = dma.done %s1355, 128
        $region64: #{tpu_custom_call.1} parent=59 // pred_fallthru
          _
      $region60: #{tpu_custom_call.1} parent=5 // pred_fallthru
        _
    $region6: #{tpu_custom_call.1} parent=1 // loop_footer
      %s22 = sadd.s32 1, %s18
    $region7: #{tpu_custom_call.1} parent=1 // loop_footer_branch
      %17 = sbr.rel target = $region3
    $region8: #{tpu_custom_call.1} parent=1 // loop_exit
      _
    %1360 = vsyncpa [#allocation3], 1
    %s1361 = scalar_lea.sflag [#allocation3], 1
    %1362 = vsyncpa %s1361, 1
    %1363 = vsyncpa [#allocation6], 1
    %1364 = vsyncpa [#allocation4], 1
    %s1365 = scalar_lea.sflag [#allocation4], 1
    %1366 = vsyncpa %s1365, 1

</llo_original>
